<compile_context>
chip_gen: v6e
topology: v6e:2x2x1
jax: 0.10.0
libtpu: 0.0.40
codegen_flags: <defaults>
</compile_context>

<pallas_src>
import jax
import jax.numpy as jnp
from jax import lax
from jax.experimental import pallas as pl
from jax.experimental.pallas import tpu as pltpu

_LANES = 128


def _conv_stats_kernel(cols_ref, w_ref, conv_ref, stats_ref):
    """Phase 1: conv tile (single folded-K matmul) + partial BN stats.

    cols_ref : (TP, K)        bf16  im2col rows, K = KH*KW*Cin
    w_ref    : (K, Coutp)     bf16  flattened weights, Cout zero-padded to 128 lanes
    conv_ref : (TP, Coutp)    f32   conv output tile
    stats_ref: (1, 8, Coutp)  f32   row 0 = sum over tile rows, row 1 = sum of squares
    """
    acc = jnp.dot(cols_ref[...], w_ref[...], preferred_element_type=jnp.float32)
    conv_ref[...] = acc
    s = jnp.sum(acc, axis=0, keepdims=True)          # (1, Coutp)   cross-sublane -> XLU
    sq = jnp.sum(acc * acc, axis=0, keepdims=True)   # (1, Coutp)
    pad_rows = jnp.zeros((6, acc.shape[1]), jnp.float32)
    stats_ref[...] = jnp.concatenate([s, sq, pad_rows], axis=0)[None, :, :]


def _norm_act_kernel(conv_ref, scale_ref, shift_ref, o_ref):
    """Phase 2: y = conv * scale + shift ; ReLU.  scale/shift are (1, Coutp) f32."""
    y = conv_ref[...] * scale_ref[...] + shift_ref[...]
    o_ref[...] = jnp.maximum(y, 0.0).astype(o_ref.dtype)


def _pick_row_tile(requested, k_dim, coutp):
    """Largest multiple-of-16 row tile whose live bytes fit a conservative per-tile budget
    (sized for v7x's 64 MiB total VMEM, leaving room for 2x double-buffering)."""
    budget = 12 * 1024 * 1024
    per_row = k_dim * 2 + coutp * 4              # bf16 cols row + f32 conv row
    t = min(int(requested), max(16, budget // max(per_row, 1)))
    return max(16, (t // 16) * 16)


def _vmem_limit(live_bytes):
    est = 4 * int(live_bytes)                    # 2x double-buffering + 2x headroom
    return int(min(max(est, 32 * 1024 * 1024), 48 * 1024 * 1024))


def conv_norm_act(x_nchw, weight, bias, gamma, beta, *, stride=1, eps=1e-5,
                  row_tile=512):
    """Forward of ConvNormAct: Conv2d(+bias) -> BatchNorm2d(training stats) -> ReLU.

    Matches the PyTorch module's default path: padding=(k-1)//2 (per dim) when stride==1;
    padding=0 otherwise (the module only sets padding when no stride kwarg is given).
    """
    N, Cin, H, W = x_nchw.shape
    Cout, Cin_w, KH, KW = weight.shape
    assert Cin == Cin_w
    del bias  # exactly cancelled by training-mode BN mean subtraction (dead compute)

    if stride == 1:
        pad_h, pad_w = (KH - 1) // 2, (KW - 1) // 2
    else:
        pad_h = pad_w = 0
    H_out = (H + 2 * pad_h - KH) // stride + 1
    W_out = (W + 2 * pad_w - KW) // stride + 1
    P = N * H_out * W_out
    Kdim = KH * KW * Cin
    Coutp = max(_LANES, ((Cout + _LANES - 1) // _LANES) * _LANES)

    tp = _pick_row_tile(row_tile, Kdim, Coutp)
    num_tiles = pl.cdiv(P, tp)
    P_pad = num_tiles * tp

    # ---- glue: NCHW -> NHWC, pad, im2col with taps folded into one contraction axis ----
    # TODO(synk): replace with halo-tiled direct reads to avoid the KH*KW input blowup.
    x = jnp.transpose(x_nchw, (0, 2, 3, 1)).astype(jnp.float32)
    xp = jnp.pad(x, ((0, 0), (pad_h, pad_h), (pad_w, pad_w), (0, 0)))
    h_span = (H_out - 1) * stride + 1
    w_span = (W_out - 1) * stride + 1
    cols = jnp.concatenate(
        [xp[:, kh:kh + h_span:stride, kw:kw + w_span:stride, :].reshape(P, Cin)
         for kh in range(KH) for kw in range(KW)], axis=1)              # (P, Kdim)
    cols = jnp.pad(cols, ((0, P_pad - P), (0, 0))).astype(jnp.bfloat16)

    w_flat = jnp.transpose(weight, (2, 3, 1, 0)).reshape(Kdim, Cout).astype(jnp.float32)
    w_flat = jnp.pad(w_flat, ((0, 0), (0, Coutp - Cout))).astype(jnp.bfloat16)

    # ---- phase 1: conv tiles + per-tile partial BN stats ----
    live1 = tp * Kdim * 2 + Kdim * Coutp * 2 + tp * Coutp * 4 + 8 * Coutp * 4
    conv_out, stats = pl.pallas_call(
        _conv_stats_kernel,
        grid=(num_tiles,),
        in_specs=[
            pl.BlockSpec((tp, Kdim), lambda i: (i, 0)),
            pl.BlockSpec((Kdim, Coutp), lambda i: (0, 0)),
        ],
        out_specs=(
            pl.BlockSpec((tp, Coutp), lambda i: (i, 0)),
            pl.BlockSpec((1, 8, Coutp), lambda i: (i, 0, 0)),
        ),
        out_shape=(
            jax.ShapeDtypeStruct((P_pad, Coutp), jnp.float32),
            jax.ShapeDtypeStruct((num_tiles, 8, Coutp), jnp.float32),
        ),
        compiler_params=pltpu.CompilerParams(
            dimension_semantics=("parallel",),
            vmem_limit_bytes=_vmem_limit(live1)),
    )(cols, w_flat)

    # ---- tiny cross-tile combine + BN affine fold (plain JAX, per-channel) ----
    total = jnp.sum(stats[:, 0, :], axis=0)                  # (Coutp,)  zero-pad rows add 0
    total_sq = jnp.sum(stats[:, 1, :], axis=0)
    mean = total / P
    var = jnp.maximum(total_sq / P - mean * mean, 0.0)       # biased var (training BN)
    gamma_p = jnp.pad(gamma.astype(jnp.float32), (0, Coutp - Cout))
    beta_p = jnp.pad(beta.astype(jnp.float32), (0, Coutp - Cout))
    scale_c = gamma_p * lax.rsqrt(var + eps)
    shift_c = beta_p - mean * scale_c
    scale = scale_c.reshape(1, Coutp)
    shift = shift_c.reshape(1, Coutp)

    # ---- phase 2: per-channel FMA + ReLU over the same row tiles ----
    live2 = 2 * tp * Coutp * 4 + 2 * Coutp * 4
    out_flat = pl.pallas_call(
        _norm_act_kernel,
        grid=(num_tiles,),
        in_specs=[
            pl.BlockSpec((tp, Coutp), lambda i: (i, 0)),
            pl.BlockSpec((1, Coutp), lambda i: (0, 0)),
            pl.BlockSpec((1, Coutp), lambda i: (0, 0)),
        ],
        out_specs=pl.BlockSpec((tp, Coutp), lambda i: (i, 0)),
        out_shape=jax.ShapeDtypeStruct((P_pad, Coutp), jnp.float32),
        compiler_params=pltpu.CompilerParams(
            dimension_semantics=("parallel",),
            vmem_limit_bytes=_vmem_limit(live2)),
    )(conv_out, scale, shift)

    out = out_flat[:P, :Cout].reshape(N, H_out, W_out, Cout)
    return jnp.transpose(out, (0, 3, 1, 2)).astype(x_nchw.dtype)       # back to NCHW


def _reference(x_nchw, weight, bias, gamma, beta, stride=1, eps=1e-5):
    """Pure-JAX f32 reference: Conv2d + BatchNorm2d(training) + ReLU, NCHW."""
    Cout, _, KH, KW = weight.shape
    if stride == 1:
        pad_h, pad_w = (KH - 1) // 2, (KW - 1) // 2
    else:
        pad_h = pad_w = 0
    conv = lax.conv_general_dilated(
        x_nchw.astype(jnp.float32), weight.astype(jnp.float32),
        window_strides=(stride, stride),
        padding=[(pad_h, pad_h), (pad_w, pad_w)],
        dimension_numbers=('NCHW', 'OIHW', 'NCHW'))
    conv = conv + bias.reshape(1, Cout, 1, 1).astype(jnp.float32)
    mean = conv.mean(axis=(0, 2, 3), keepdims=True)
    var = jnp.square(conv - mean).mean(axis=(0, 2, 3), keepdims=True)
    y = (conv - mean) * lax.rsqrt(var + eps) * gamma.reshape(1, Cout, 1, 1) \
        + beta.reshape(1, Cout, 1, 1)
    return jnp.maximum(y, 0.0)


if __name__ == "__main__":
    # ConvNormAct(4, 8, 3) -> Conv2d(4, 8, k=3, stride=1, padding=1) + BN(8) + ReLU
    N, Cin, H, W = 2, 4, 16, 16
    Cout, K = 8, 3

    key = jax.random.PRNGKey(0)
    kx, kw, kb = jax.random.split(key, 3)
    x = jax.random.normal(kx, (N, Cin, H, W), dtype=jnp.float32)
    weight = jax.random.normal(kw, (Cout, Cin, K, K), dtype=jnp.float32) * 0.1
    bias = jax.random.normal(kb, (Cout,), dtype=jnp.float32) * 0.1
    gamma = jnp.ones((Cout,), jnp.float32)   # BatchNorm2d default init
    beta = jnp.zeros((Cout,), jnp.float32)   # BatchNorm2d default init

    # row_tile=192 -> grid of 3 row tiles over P=512 with a ragged (zero-padded) last tile.
    out = conv_norm_act(x, weight, bias, gamma, beta, row_tile=192)
    jax.block_until_ready(out)

    ref = _reference(x, weight, bias, gamma, beta)
    assert out.shape == (N, Cout, H, W)
    # bf16 matmul operands (f32 accumulation / BN math) -> mixed-precision tolerance.
    assert jnp.allclose(out, ref, atol=5e-2, rtol=5e-2), "mismatch vs reference"

    print("KERNEL_OK")
</pallas_src>

<mosaic_0001>
module attributes {stable_mosaic.version = 11 : i64} {
  func.func @_conv_stats_kernel(%arg0: i32, %arg1: memref<192x36xbf16, #tpu.memory_space<vmem>>, %arg2: memref<36x128xbf16, #tpu.memory_space<vmem>>, %arg3: memref<192x128xf32, #tpu.memory_space<vmem>>, %arg4: memref<1x8x128xf32, #tpu.memory_space<vmem>>) attributes {dimension_semantics = [#tpu.dimension_semantics<parallel>], iteration_bounds = array<i64: 3>, scalar_prefetch = 0 : i64, scratch_operands = 0 : i64, tpu.core_type = #tpu.core_type<tc>, window_params = [{transform_indices = @transform_0, window_bounds = array<i64: 192, 36>}, {pipeline_mode = #tpu.pipeline_mode<synchronous>, transform_indices = @transform_1, window_bounds = array<i64: 36, 128>}, {transform_indices = @transform_2, window_bounds = array<i64: 192, 128>}, {transform_indices = @transform_3, window_bounds = array<i64: 1, 8, 128>}]} {
    %c0 = arith.constant 0 : index
    %c0_0 = arith.constant 0 : index
    %0 = vector.load %arg1[%c0, %c0_0] : memref<192x36xbf16, #tpu.memory_space<vmem>>, vector<192x36xbf16>
    %c0_1 = arith.constant 0 : index
    %c0_2 = arith.constant 0 : index
    %1 = vector.load %arg2[%c0_1, %c0_2] : memref<36x128xbf16, #tpu.memory_space<vmem>>, vector<36x128xbf16>
    %cst = arith.constant dense<0.000000e+00> : vector<192x128xf32>
    %2 = tpu.matmul %0, %1, %cst {dimension_numbers = #tpu.dot_dimension_numbers<[1], [0], [0], [1], [0, 0, 1, 1], [], []>} : vector<192x36xbf16>, vector<36x128xbf16>, vector<192x128xf32> -> vector<192x128xf32>
    %c0_3 = arith.constant 0 : index
    %c0_4 = arith.constant 0 : index
    %3 = vector.load %arg3[%c0_3, %c0_4] : memref<192x128xf32, #tpu.memory_space<vmem>>, vector<192x128xf32>
    tpu.vector_store %arg3[%c0_3, %c0_4], %2 {strides = array<i32>} : memref<192x128xf32, #tpu.memory_space<vmem>>, vector<192x128xf32>,
    %cst_5 = arith.constant dense<0.000000e+00> : vector<128xf32>
    %4 = vector.multi_reduction <add>, %2, %cst_5 [0] : vector<192x128xf32> to vector<128xf32>
    %5 = vector.shape_cast %4 : vector<128xf32> to vector<1x128xf32>
    %6 = arith.mulf %2, %2 : vector<192x128xf32>
    %cst_6 = arith.constant dense<0.000000e+00> : vector<128xf32>
    %7 = vector.multi_reduction <add>, %6, %cst_6 [0] : vector<192x128xf32> to vector<128xf32>
    %8 = vector.shape_cast %7 : vector<128xf32> to vector<1x128xf32>
    %cst_7 = arith.constant 0.000000e+00 : f32
    %9 = vector.broadcast %cst_7 : f32 to vector<6x128xf32>
    %10 = tpu.concatenate %5, %8, %9 in 0 : vector<1x128xf32>, vector<1x128xf32>, vector<6x128xf32> -> vector<8x128xf32>
    %11 = vector.shape_cast %10 : vector<8x128xf32> to vector<1x8x128xf32>
    %c0_8 = arith.constant 0 : index
    %c0_9 = arith.constant 0 : index
    %c0_10 = arith.constant 0 : index
    %12 = vector.load %arg4[%c0_8, %c0_9, %c0_10] : memref<1x8x128xf32, #tpu.memory_space<vmem>>, vector<1x8x128xf32>
    tpu.vector_store %arg4[%c0_8, %c0_9, %c0_10], %11 {strides = array<i32>} : memref<1x8x128xf32, #tpu.memory_space<vmem>>, vector<1x8x128xf32>,
    return
  }
  func.func @transform_0(%arg0: i32) -> (i32, i32) {
    %c0_i32 = arith.constant 0 : i32
    %c0_i32_0 = arith.constant 0 : i32
    return %arg0, %c0_i32 : i32, i32
  }
  func.func @transform_1(%arg0: i32) -> (i32, i32) {
    %c0_i32 = arith.constant 0 : i32
    %c0_i32_0 = arith.constant 0 : i32
    %c0_i32_1 = arith.constant 0 : i32
    return %c0_i32, %c0_i32_0 : i32, i32
  }
  func.func @transform_2(%arg0: i32) -> (i32, i32) {
    %c0_i32 = arith.constant 0 : i32
    %c0_i32_0 = arith.constant 0 : i32
    return %arg0, %c0_i32 : i32, i32
  }
  func.func @transform_3(%arg0: i32) -> (i32, i32, i32) {
    %c0_i32 = arith.constant 0 : i32
    %c0_i32_0 = arith.constant 0 : i32
    %c0_i32_1 = arith.constant 0 : i32
    return %arg0, %c0_i32, %c0_i32_0 : i32, i32, i32
  }
}

</mosaic_0001>

<llo_original>
// kernel: tpu_custom_call.1
$region0: #{tpu_custom_call.1}
  #allocation0 [shape = 'u32[]', space=smem, size = 0x4, offset = 0x4, fixed_abs, tag = 'smem constant byte address 0x4 - core index']
  #allocation1 [shape = 'u32[144,128]{1,0:T(1,128)}', space=vmem, size = 0x12000, scoped, tag = 'internal scratch']
  %s0 = inlined_call_operand.vmem [shape: bf16[576,36], index: 0, kind: input, shape index: {}]
  %s1 = inlined_call_operand.vmem [shape: bf16[36,128], index: 1, kind: input, shape index: {}]
  %s2 = inlined_call_operand.hbm [shape: f32[576,128], index: 2, kind: output, shape index: {0}]
  %s3 = inlined_call_operand.hbm [shape: f32[3,8,128], index: 3, kind: output, shape index: {1}]
  %4 = xla_tuple %s2, %s3
  %s5 = sld [smem:[#allocation0]]
  $region49: #{tpu_custom_call.1} parent=0
    _
  %s7 = ssub.s32 1, %s5
  %s8 = scalar_select 0, %s7, %s5
  $region1: #{tpu_custom_call.1} parent=0
    #allocation2 [shape = 'u8[196608]{0}', space=vmem, size = 0x30000, scoped, tag = 'output window, operand 0']
    #allocation3 [shape = 's32[2]{0}', space=sflag, size = 0x8, scoped, tag = 'scoped memory for tpu_custom_call.1']
    #allocation4 [shape = 'u8[8192]{0}', space=vmem, size = 0x2000, scoped, tag = 'output window, operand 1']
    #allocation5 [shape = 's32[2]{0}', space=sflag, size = 0x8, scoped, tag = 'scoped memory for tpu_custom_call.1']
    %9 = vsyncpa [#allocation3], 0
    %s10 = scalar_lea.sflag [#allocation3], 1
    %11 = vsyncpa %s10, 0
    %12 = vsyncpa [#allocation5], 0
    %s13 = scalar_lea.sflag [#allocation5], 1
    %14 = vsyncpa %s13, 0
    loop: start=0, step=1, limit=5
    $region2: #{tpu_custom_call.1} parent=1 // loop_pre_header
      _
    $region3: #{tpu_custom_call.1} parent=1 // loop_header
      %s16 = sphi 0, %s20
      %p17 = scmp.ge.s32.totalorder %s16, 5
      %s26 = sphi 0, %s28
      %s29 = sphi 0, %s26
      %s30 = sphi 0, %s29
      %s46 = sphi 0, %s30
      %s50 = sphi 0, %s50
      %s52 = sphi 0, %s50
      %s53 = sphi 0, %s52
      %s67 = sphi 0, %s53
      %s73 = sphi 0, %s75
      %s76 = sphi 0, %s73
      %s77 = sphi 0, %s76
      %s93 = sphi 0, %s77
      %s99 = sphi 0, %s101
      %s102 = sphi 0, %s99
      %s103 = sphi 0, %s102
      %s119 = sphi 0, %s103
    $region4: #{tpu_custom_call.1} parent=1 // loop_header_branch
      %19 = sbr.rel (%p17) target = $region8
    $region5: #{tpu_custom_call.1} parent=1 // loop_body
      %s21 = ssub.s32 %s16, 1
      %s22 = ssub.s32 %s16, 2
      %s23 = sadd.s32 %s16, 1
      %s24 = ssub.s32 %s16, %s23
      %p25 = scmp.eq.s32.totalorder %s24, 0
      %s27 = sadd.s32 %s26, 1
      %s28 = scalar_select %p25, %s26, %s27
      %p31 = pneg %p25
      %p32 = scmp.eq.s32.totalorder %s16, 2
      %p33 = por %p31, %p32
      %p34 = scmp.ne.s32.totalorder %s26, %s29
      %p35 = scmp.eq.s32.totalorder %s16, 0
      %p36 = por %p34, %p35
      %p37 = scmp.ne.s32.totalorder %s26, %s29
      %p38 = scmp.eq.s32.totalorder %s21, 2
      %p39 = por %p37, %p38
      %p40 = scmp.ne.s32.totalorder %s29, %s30
      %p41 = scmp.eq.s32.totalorder %s21, 0
      %p42 = por %p40, %p41
      %p43 = scmp.ne.s32.totalorder %s29, %s30
      %p44 = scmp.eq.s32.totalorder %s22, 2
      %p45 = por %p43, %p44
      %p47 = scmp.ne.s32.totalorder %s30, %s46
      %p48 = scmp.eq.s32.totalorder %s22, 0
      %p49 = por %p47, %p48
      %s51 = sadd.s32 %s50, 1
      %p54 = scmp.eq.s32.totalorder %s16, 2
      %p55 = scmp.ne.s32.totalorder %s50, %s52
      %p56 = scmp.eq.s32.totalorder %s16, 0
      %p57 = por %p55, %p56
      %p58 = scmp.ne.s32.totalorder %s50, %s52
      %p59 = scmp.eq.s32.totalorder %s21, 2
      %p60 = por %p58, %p59
      %p61 = scmp.ne.s32.totalorder %s52, %s53
      %p62 = scmp.eq.s32.totalorder %s21, 0
      %p63 = por %p61, %p62
      %p64 = scmp.ne.s32.totalorder %s52, %s53
      %p65 = scmp.eq.s32.totalorder %s22, 2
      %p66 = por %p64, %p65
      %p68 = scmp.ne.s32.totalorder %s53, %s67
      %p69 = scmp.eq.s32.totalorder %s22, 0
      %p70 = por %p68, %p69
      %s71 = ssub.s32 %s16, %s23
      %p72 = scmp.eq.s32.totalorder %s71, 0
      %s74 = sadd.s32 %s73, 1
      %s75 = scalar_select %p72, %s73, %s74
      %p78 = pneg %p72
      %p79 = scmp.eq.s32.totalorder %s16, 2
      %p80 = por %p78, %p79
      %p81 = scmp.ne.s32.totalorder %s73, %s76
      %p82 = scmp.eq.s32.totalorder %s16, 0
      %p83 = por %p81, %p82
      %p84 = scmp.ne.s32.totalorder %s73, %s76
      %p85 = scmp.eq.s32.totalorder %s21, 2
      %p86 = por %p84, %p85
      %p87 = scmp.ne.s32.totalorder %s76, %s77
      %p88 = scmp.eq.s32.totalorder %s21, 0
      %p89 = por %p87, %p88
      %p90 = scmp.ne.s32.totalorder %s76, %s77
      %p91 = scmp.eq.s32.totalorder %s22, 2
      %p92 = por %p90, %p91
      %p94 = scmp.ne.s32.totalorder %s77, %s93
      %p95 = scmp.eq.s32.totalorder %s22, 0
      %p96 = por %p94, %p95
      %s97 = ssub.s32 %s16, %s23
      %p98 = scmp.eq.s32.totalorder %s97, 0
      %s100 = sadd.s32 %s99, 1
      %s101 = scalar_select %p98, %s99, %s100
      %p104 = pneg %p98
      %p105 = scmp.eq.s32.totalorder %s16, 2
      %p106 = por %p104, %p105
      %p107 = scmp.ne.s32.totalorder %s99, %s102
      %p108 = scmp.eq.s32.totalorder %s16, 0
      %p109 = por %p107, %p108
      %p110 = scmp.ne.s32.totalorder %s99, %s102
      %p111 = scmp.eq.s32.totalorder %s21, 2
      %p112 = por %p110, %p111
      %p113 = scmp.ne.s32.totalorder %s102, %s103
      %p114 = scmp.eq.s32.totalorder %s21, 0
      %p115 = por %p113, %p114
      %p116 = scmp.ne.s32.totalorder %s102, %s103
      %p117 = scmp.eq.s32.totalorder %s22, 2
      %p118 = por %p116, %p117
      %p120 = scmp.ne.s32.totalorder %s103, %s119
      %p121 = scmp.eq.s32.totalorder %s22, 0
      %p122 = por %p120, %p121
      %p123 = scmp.le.s32.totalorder 1, %s16
      %p124 = scmp.lt.s32.totalorder %s16, 4
      %p125 = pnand %p123, %p124
      %p126 = pneg %p125
      // Predicated region
      $region9: #{tpu_custom_call.1} parent=5 // pred_check
        _
      $region10: #{tpu_custom_call.1} parent=5 // pred_check_branch
        %128 = sbr.rel (%p125) target = $region12
      $region11: #{tpu_custom_call.1} parent=5 // pred_region
        %s129 = ssub.s32 %s16, 1
        // Predicated region
        $region13: #{tpu_custom_call.1} parent=11 // pred_check
          %p130 = pneg %p63
        $region14: #{tpu_custom_call.1} parent=11 // pred_check_branch
          %132 = sbr.rel (%p130) target = $region16
        $region15: #{tpu_custom_call.1} parent=11 // pred_region
          _
        $region16: #{tpu_custom_call.1} parent=11 // pred_fallthru
          _
      $region12: #{tpu_custom_call.1} parent=5 // pred_fallthru
        _
      %p133 = scmp.lt.s32.totalorder %s16, 3
      // Predicated region
      $region17: #{tpu_custom_call.1} parent=5 // pred_check
        %p134 = pneg %p133
      $region18: #{tpu_custom_call.1} parent=5 // pred_check_branch
        %136 = sbr.rel (%p134) target = $region20
      $region19: #{tpu_custom_call.1} parent=5 // pred_region
        // Predicated region
        $region21: #{tpu_custom_call.1} parent=19 // pred_check
          %p137 = pneg %p36
        $region22: #{tpu_custom_call.1} parent=19 // pred_check_branch
          %139 = sbr.rel (%p137) target = $region24
        $region23: #{tpu_custom_call.1} parent=19 // pred_region
          %s140 = smul.u32 24, %s16
          %p141 = scmp.lt.s32.totalorder %s140, 71
          %s142 = scalar_select %p141, %s140, 71
          %s143 = smul.addr %s142, 4
          %s144 = scalar_lea.vmem %s0, %s143
          %s145 = smul.u32 24, %s16
        $region24: #{tpu_custom_call.1} parent=19 // pred_fallthru
          _
      $region20: #{tpu_custom_call.1} parent=5 // pred_fallthru
        _
      %p146 = scmp.le.s32.totalorder 1, %s16
      %p147 = scmp.lt.s32.totalorder %s16, 4
      %p148 = pnand %p146, %p147
      %p149 = pneg %p148
      // Predicated region
      $region25: #{tpu_custom_call.1} parent=5 // pred_check
        _
      $region26: #{tpu_custom_call.1} parent=5 // pred_check_branch
        %151 = sbr.rel (%p148) target = $region28
      $region27: #{tpu_custom_call.1} parent=5 // pred_region
        %s152 = ssub.s32 %s16, 1
        %s153 = smul.u32 24, %s21
        %p154 = scmp.lt.s32.totalorder %s153, 71
        %s155 = scalar_select %p154, %s153, 71
        %s156 = smul.addr %s155, 4
        %s157 = scalar_lea.vmem %s0, %s156
        %p158 = pneg %p42
        %p159 = pneg %p39
        %p160 = pneg %p63
        %p161 = pneg %p60
        %p162 = pneg %p89
        %p163 = pneg %p86
        %s164 = sand.u32 %s76, 1
        %s165 = scalar_lea.sflag [#allocation3], %s164
        %s166 = sand.u32 %s76, 1
        %s167 = smul.addr %s166, 192
        %s168 = scalar_lea.vmem [#allocation2], %s167
        %p169 = pneg %p115
        %p170 = pneg %p112
        %s171 = sand.u32 %s102, 1
        %s172 = scalar_lea.sflag [#allocation5], %s171
        %s173 = sand.u32 %s102, 1
        %s174 = smul.addr %s173, 8
        %s175 = scalar_lea.vmem [#allocation4], %s174
        %s176 = smul.u32 24, %s21
        %p177 = scmp.lt.s32.totalorder %s176, 71
        %s178 = scalar_select %p177, %s176, 71
        %s179 = smul.addr %s178, 4
        %s180 = scalar_lea.vmem %s0, %s179
        %s181 = smul.u32 24, %s21
        %s182 = smul.u32 24, %s21
        %v184 = vld [vmem:[%s180] sm:$0xf]
        %v185 = vld [vmem:[%s180 + $0x4] sm:$0xf]
        %v186 = vld [vmem:[%s180 + $0x8] sm:$0xf]
        %v187 = vld [vmem:[%s180 + $0xc] sm:$0xf]
        %v188 = vld [vmem:[%s180 + $0x10] sm:$0xf]
        %v189 = vld [vmem:[%s180 + $0x14] sm:$0xf]
        %v190 = vld [vmem:[%s180 + $0x18] sm:$0xf]
        %v191 = vld [vmem:[%s180 + $0x1c] sm:$0xf]
        %v192 = vld [vmem:[%s180 + $0x20] sm:$0xf]
        %v193 = vld [vmem:[%s180 + $0x24] sm:$0xf]
        %v194 = vld [vmem:[%s180 + $0x28] sm:$0xf]
        %v195 = vld [vmem:[%s180 + $0x2c] sm:$0xf]
        %v196 = vld [vmem:[%s180 + $0x30] sm:$0xf]
        %v197 = vld [vmem:[%s180 + $0x34] sm:$0xf]
        %v198 = vld [vmem:[%s180 + $0x38] sm:$0xf]
        %v199 = vld [vmem:[%s180 + $0x3c] sm:$0xf]
        %v200 = vld [vmem:[%s180 + $0x40] sm:$0xf]
        %v201 = vld [vmem:[%s180 + $0x44] sm:$0xf]
        %v202 = vld [vmem:[%s180 + $0x48] sm:$0xf]
        %v203 = vld [vmem:[%s180 + $0x4c] sm:$0xf]
        %v204 = vld [vmem:[%s180 + $0x50] sm:$0xf]
        %v205 = vld [vmem:[%s180 + $0x54] sm:$0xf]
        %v206 = vld [vmem:[%s180 + $0x58] sm:$0xf]
        %v207 = vld [vmem:[%s180 + $0x5c] sm:$0xf]
        %v208 = vld [vmem:[%s1] sm:$0xf]
        %v209 = vld [vmem:[%s1 + $0x4] sm:$0xf]
        %v210 = vld [vmem:[%s1 + $0x8] sm:$0xf]
        %v211 = vld [vmem:[%s1 + $0xc] sm:$0xf]
        %v212 = vld [vmem:[%s1 + $0x10] sm:$0x3]
        %v237 = vunpack.c.l.b16 %v184
        %v238 = vunpack.c.l.b16 %v185
        %v239 = vunpack.c.l.b16 %v186
        %v240 = vunpack.c.l.b16 %v187
        %v241 = vunpack.c.l.b16 %v188
        %v242 = vunpack.c.l.b16 %v189
        %v243 = vunpack.c.l.b16 %v190
        %v244 = vunpack.c.l.b16 %v191
        %v245 = vunpack.c.l.b16 %v192
        %v246 = vunpack.c.l.b16 %v193
        %v247 = vunpack.c.l.b16 %v194
        %v248 = vunpack.c.l.b16 %v195
        %v249 = vunpack.c.l.b16 %v196
        %v250 = vunpack.c.l.b16 %v197
        %v251 = vunpack.c.l.b16 %v198
        %v252 = vunpack.c.l.b16 %v199
        %v253 = vunpack.c.l.b16 %v200
        %v254 = vunpack.c.l.b16 %v201
        %v255 = vunpack.c.l.b16 %v202
        %v256 = vunpack.c.l.b16 %v203
        %v257 = vunpack.c.l.b16 %v204
        %v258 = vunpack.c.l.b16 %v205
        %v259 = vunpack.c.l.b16 %v206
        %v260 = vunpack.c.l.b16 %v207
        %v261 = vpack.c.b16 %v238, %v237
        %v262 = vpack.c.b16 %v240, %v239
        %v263 = vpack.c.b16 %v242, %v241
        %v264 = vpack.c.b16 %v244, %v243
        %v265 = vpack.c.b16 %v246, %v245
        %v266 = vpack.c.b16 %v248, %v247
        %v267 = vpack.c.b16 %v250, %v249
        %v268 = vpack.c.b16 %v252, %v251
        %v269 = vpack.c.b16 %v254, %v253
        %v270 = vpack.c.b16 %v256, %v255
        %v271 = vpack.c.b16 %v258, %v257
        %v272 = vpack.c.b16 %v260, %v259
        %v278 = vunpack.c.l.b16 %v208
        %v279 = vunpack.c.l.b16 %v209
        %v280 = vunpack.c.l.b16 %v210
        %v281 = vunpack.c.l.b16 %v211
        %v282 = vunpack.c.l.b16 %v212
        %v283 = vpack.c.b16 %v279, %v278
        %v284 = vpack.c.b16 %v281, %v280
        %v285 = vpack.c.b16 %v282, %v282
        %vm288 = vcmask 293888
        %v290 = vsel %vm288, %v261, 0
        %v293 = vsel %vm288, %v262, 0
        %v296 = vsel %vm288, %v263, 0
        %v299 = vsel %vm288, %v264, 0
        %v302 = vsel %vm288, %v265, 0
        %v305 = vsel %vm288, %v266, 0
        %v308 = vsel %vm288, %v267, 0
        %v311 = vsel %vm288, %v268, 0
        %v314 = vsel %vm288, %v269, 0
        %v317 = vsel %vm288, %v270, 0
        %v320 = vsel %vm288, %v271, 0
        %v323 = vsel %vm288, %v272, 0
        %vm325 = vcmask 1041408
        %v327 = vsel %vm325, %v285, 0
        %329 = vmatprep.subr.bf16.mxu0 0
        %330 = vmatpush1.bf16.msra.mxu0 0
        %331 = vmatprep.subr.bf16.mxu0 0
        %332 = vmatpush1.bf16.msra.mxu0 0
        %333 = vmatprep.subr.bf16.mxu0 0
        %334 = vmatpush1.bf16.msra.mxu0 0
        %335 = vmatprep.subr.bf16.mxu0 0
        %336 = vmatpush1.bf16.msra.mxu0 0
        %337 = vmatprep.subr.bf16.mxu0 0
        %338 = vmatpush1.bf16.msra.mxu0 0
        %339 = vmatprep.subr.bf16.mxu0 0
        %340 = vmatpush1.bf16.msra.mxu0 %v327
        %341 = vmatprep.subr.bf16.mxu0 0
        %342 = vmatpush1.bf16.msra.mxu0 %v284
        %343 = vmatprep.subr.bf16.mxu0 0
        %344 = vmatpush1.bf16.msra.mxu0 %v283
        %345 = vmatprep.subr.bf16.mxu0 0
        %346 = vmatpush2.bf16.msra.mxu0 0
        %347 = vmatprep.subr.bf16.mxu0 0
        %348 = vmatpush2.bf16.msra.mxu0 0
        %349 = vmatprep.subr.bf16.mxu0 0
        %350 = vmatpush2.bf16.msra.mxu0 0
        %351 = vmatprep.subr.bf16.mxu0 0
        %352 = vmatpush2.bf16.msra.mxu0 0
        %353 = vmatprep.subr.bf16.mxu0 0
        %354 = vmatpush2.bf16.msra.mxu0 0
        %355 = vmatprep.subr.bf16.mxu0 0
        %356 = vmatpush2.bf16.msra.mxu0 0
        %357 = vmatprep.subr.bf16.mxu0 0
        %358 = vmatpush2.bf16.msra.mxu0 0
        %359 = vmatprep.subr.bf16.mxu0 0
        %360 = vmatpush2.bf16.msra.mxu0 0
        %361 = vmatprep.mubr.bf16.mxu0 0
        %362 = vmatmul.mubr.bf16.gmra.mxu0 %v290
        %v363 = vpop.f32.mrf.mxu0
        %v364 = vadd.f32 0.0, %v363
        %v365 = vpop.f32.mrf.mxu0
        %v366 = vpop.f32.mrf.mxu0
        %v367 = vadd.f32 0.0, %v366
        %v368 = vpop.f32.mrf.mxu0
        %369 = vmatprep.mubr.bf16.mxu0 0
        %370 = vmatmul.mubr.bf16.gmra.mxu0 %v293
        %v371 = vpop.f32.mrf.mxu0
        %v372 = vadd.f32 0.0, %v371
        %v373 = vpop.f32.mrf.mxu0
        %v374 = vpop.f32.mrf.mxu0
        %v375 = vadd.f32 0.0, %v374
        %v376 = vpop.f32.mrf.mxu0
        %377 = vmatprep.mubr.bf16.mxu0 0
        %378 = vmatmul.mubr.bf16.gmra.mxu0 %v296
        %v379 = vpop.f32.mrf.mxu0
        %v380 = vadd.f32 0.0, %v379
        %v381 = vpop.f32.mrf.mxu0
        %v382 = vpop.f32.mrf.mxu0
        %v383 = vadd.f32 0.0, %v382
        %v384 = vpop.f32.mrf.mxu0
        %385 = vmatprep.mubr.bf16.mxu0 0
        %386 = vmatmul.mubr.bf16.gmra.mxu0 %v299
        %v387 = vpop.f32.mrf.mxu0
        %v388 = vadd.f32 0.0, %v387
        %v389 = vpop.f32.mrf.mxu0
        %v390 = vpop.f32.mrf.mxu0
        %v391 = vadd.f32 0.0, %v390
        %v392 = vpop.f32.mrf.mxu0
        %393 = vmatprep.mubr.bf16.mxu0 0
        %394 = vmatmul.mubr.bf16.gmra.mxu0 %v302
        %v395 = vpop.f32.mrf.mxu0
        %v396 = vadd.f32 0.0, %v395
        %v397 = vpop.f32.mrf.mxu0
        %v398 = vpop.f32.mrf.mxu0
        %v399 = vadd.f32 0.0, %v398
        %v400 = vpop.f32.mrf.mxu0
        %401 = vmatprep.mubr.bf16.mxu0 0
        %402 = vmatmul.mubr.bf16.gmra.mxu0 %v305
        %v403 = vpop.f32.mrf.mxu0
        %v404 = vadd.f32 0.0, %v403
        %v405 = vpop.f32.mrf.mxu0
        %v406 = vpop.f32.mrf.mxu0
        %v407 = vadd.f32 0.0, %v406
        %v408 = vpop.f32.mrf.mxu0
        %409 = vmatprep.mubr.bf16.mxu0 0
        %410 = vmatmul.mubr.bf16.gmra.mxu0 %v308
        %v411 = vpop.f32.mrf.mxu0
        %v412 = vadd.f32 0.0, %v411
        %v413 = vpop.f32.mrf.mxu0
        %v414 = vpop.f32.mrf.mxu0
        %v415 = vadd.f32 0.0, %v414
        %v416 = vpop.f32.mrf.mxu0
        %417 = vmatprep.mubr.bf16.mxu0 0
        %418 = vmatmul.mubr.bf16.gmra.mxu0 %v311
        %v419 = vpop.f32.mrf.mxu0
        %v420 = vadd.f32 0.0, %v419
        %v421 = vpop.f32.mrf.mxu0
        %v422 = vpop.f32.mrf.mxu0
        %v423 = vadd.f32 0.0, %v422
        %v424 = vpop.f32.mrf.mxu0
        %425 = vmatprep.mubr.bf16.mxu0 0
        %426 = vmatmul.mubr.bf16.gmra.mxu0 %v314
        %v427 = vpop.f32.mrf.mxu0
        %v428 = vadd.f32 0.0, %v427
        %v429 = vpop.f32.mrf.mxu0
        %v430 = vpop.f32.mrf.mxu0
        %v431 = vadd.f32 0.0, %v430
        %v432 = vpop.f32.mrf.mxu0
        %433 = vmatprep.mubr.bf16.mxu0 0
        %434 = vmatmul.mubr.bf16.gmra.mxu0 %v317
        %v435 = vpop.f32.mrf.mxu0
        %v436 = vadd.f32 0.0, %v435
        %v437 = vpop.f32.mrf.mxu0
        %v438 = vpop.f32.mrf.mxu0
        %v439 = vadd.f32 0.0, %v438
        %v440 = vpop.f32.mrf.mxu0
        %441 = vmatprep.mubr.bf16.mxu0 0
        %442 = vmatmul.mubr.bf16.gmra.mxu0 %v320
        %v443 = vpop.f32.mrf.mxu0
        %v444 = vadd.f32 0.0, %v443
        %v445 = vpop.f32.mrf.mxu0
        %v446 = vpop.f32.mrf.mxu0
        %v447 = vadd.f32 0.0, %v446
        %v448 = vpop.f32.mrf.mxu0
        %449 = vmatprep.mubr.bf16.mxu0 0
        %450 = vmatmul.mubr.bf16.gmra.mxu0 %v323
        %v451 = vpop.f32.mrf.mxu0
        %v452 = vadd.f32 0.0, %v451
        %v453 = vpop.f32.mrf.mxu0
        %v454 = vpop.f32.mrf.mxu0
        %v455 = vadd.f32 0.0, %v454
        %v456 = vpop.f32.mrf.mxu0
        %457 = vdwg.mxu0
        %458 = vst [vmem:[%s168] sm:$0xff] %v364
        %459 = vst [vmem:[%s168 + $0x8] sm:$0xff] %v367
        %460 = vst [vmem:[%s168 + $0x10] sm:$0xff] %v372
        %461 = vst [vmem:[%s168 + $0x18] sm:$0xff] %v375
        %462 = vst [vmem:[%s168 + $0x20] sm:$0xff] %v380
        %463 = vst [vmem:[%s168 + $0x28] sm:$0xff] %v383
        %464 = vst [vmem:[%s168 + $0x30] sm:$0xff] %v388
        %465 = vst [vmem:[%s168 + $0x38] sm:$0xff] %v391
        %466 = vst [vmem:[%s168 + $0x40] sm:$0xff] %v396
        %467 = vst [vmem:[%s168 + $0x48] sm:$0xff] %v399
        %468 = vst [vmem:[%s168 + $0x50] sm:$0xff] %v404
        %469 = vst [vmem:[%s168 + $0x58] sm:$0xff] %v407
        %470 = vst [vmem:[%s168 + $0x60] sm:$0xff] %v412
        %471 = vst [vmem:[%s168 + $0x68] sm:$0xff] %v415
        %472 = vst [vmem:[%s168 + $0x70] sm:$0xff] %v420
        %473 = vst [vmem:[%s168 + $0x78] sm:$0xff] %v423
        %474 = vst [vmem:[%s168 + $0x80] sm:$0xff] %v428
        %475 = vst [vmem:[%s168 + $0x88] sm:$0xff] %v431
        %476 = vst [vmem:[%s168 + $0x90] sm:$0xff] %v436
        %477 = vst [vmem:[%s168 + $0x98] sm:$0xff] %v439
        %478 = vst [vmem:[%s168 + $0xa0] sm:$0xff] %v444
        %479 = vst [vmem:[%s168 + $0xa8] sm:$0xff] %v447
        %480 = vst [vmem:[%s168 + $0xb0] sm:$0xff] %v452
        %481 = vst [vmem:[%s168 + $0xb8] sm:$0xff] %v455
        %v482 = vadd.f32 %v364, %v367
        %v483 = vadd.f32 %v482, %v372
        %v484 = vadd.f32 %v483, %v375
        %v485 = vadd.f32 %v484, %v380
        %v486 = vadd.f32 %v485, %v383
        %v487 = vadd.f32 %v486, %v388
        %v488 = vadd.f32 %v487, %v391
        %v489 = vadd.f32 %v488, %v396
        %v490 = vadd.f32 %v489, %v399
        %v491 = vadd.f32 %v490, %v404
        %v492 = vadd.f32 %v491, %v407
        %v493 = vadd.f32 %v492, %v412
        %v494 = vadd.f32 %v493, %v415
        %v495 = vadd.f32 %v494, %v420
        %v496 = vadd.f32 %v495, %v423
        %v497 = vadd.f32 %v496, %v428
        %v498 = vadd.f32 %v497, %v431
        %v499 = vadd.f32 %v498, %v436
        %v500 = vadd.f32 %v499, %v439
        %v501 = vadd.f32 %v500, %v444
        %v502 = vadd.f32 %v501, %v447
        %v503 = vadd.f32 %v502, %v452
        %v504 = vadd.f32 %v503, %v455
        %v505 = vrot.slane %v504, 4
        %v506 = vadd.f32 %v504, %v505
        %v507 = vrot.slane %v506, 2
        %v508 = vadd.f32 %v506, %v507
        %v509 = vrot.slane %v508, 1
        %v510 = vadd.f32 %v508, %v509
        %v511 = vmul.f32 %v364, %v364
        %v512 = vmul.f32 %v367, %v367
        %v513 = vmul.f32 %v372, %v372
        %v514 = vmul.f32 %v375, %v375
        %v515 = vmul.f32 %v380, %v380
        %v516 = vmul.f32 %v383, %v383
        %v517 = vmul.f32 %v388, %v388
        %v518 = vmul.f32 %v391, %v391
        %v519 = vmul.f32 %v396, %v396
        %v520 = vmul.f32 %v399, %v399
        %v521 = vmul.f32 %v404, %v404
        %v522 = vmul.f32 %v407, %v407
        %v523 = vmul.f32 %v412, %v412
        %v524 = vmul.f32 %v415, %v415
        %v525 = vmul.f32 %v420, %v420
        %v526 = vmul.f32 %v423, %v423
        %v527 = vmul.f32 %v428, %v428
        %v528 = vmul.f32 %v431, %v431
        %v529 = vmul.f32 %v436, %v436
        %v530 = vmul.f32 %v439, %v439
        %v531 = vmul.f32 %v444, %v444
        %v532 = vmul.f32 %v447, %v447
        %v533 = vmul.f32 %v452, %v452
        %v534 = vmul.f32 %v455, %v455
        %v535 = vadd.f32 %v511, %v512
        %v536 = vadd.f32 %v535, %v513
        %v537 = vadd.f32 %v536, %v514
        %v538 = vadd.f32 %v537, %v515
        %v539 = vadd.f32 %v538, %v516
        %v540 = vadd.f32 %v539, %v517
        %v541 = vadd.f32 %v540, %v518
        %v542 = vadd.f32 %v541, %v519
        %v543 = vadd.f32 %v542, %v520
        %v544 = vadd.f32 %v543, %v521
        %v545 = vadd.f32 %v544, %v522
        %v546 = vadd.f32 %v545, %v523
        %v547 = vadd.f32 %v546, %v524
        %v548 = vadd.f32 %v547, %v525
        %v549 = vadd.f32 %v548, %v526
        %v550 = vadd.f32 %v549, %v527
        %v551 = vadd.f32 %v550, %v528
        %v552 = vadd.f32 %v551, %v529
        %v553 = vadd.f32 %v552, %v530
        %v554 = vadd.f32 %v553, %v531
        %v555 = vadd.f32 %v554, %v532
        %v556 = vadd.f32 %v555, %v533
        %v557 = vadd.f32 %v556, %v534
        %v558 = vrot.slane %v557, 4
        %v559 = vadd.f32 %v557, %v558
        %v560 = vrot.slane %v559, 2
        %v561 = vadd.f32 %v559, %v560
        %v562 = vrot.slane %v561, 1
        %v563 = vadd.f32 %v561, %v562
        %vm564 = vcmask 1040384
        %v565 = vsel %vm564, %v510, %v563
        %v566 = vsel %vm325, %v565, 0.0
        %567 = vst [vmem:[%s175] sm:$0xff] %v566
        %s568 = sand.u32 %s76, 1
        %s569 = scalar_lea.sflag [#allocation3], %s568
        %s570 = sand.u32 %s76, 1
        %s571 = smul.addr %s570, 192
        %s572 = scalar_lea.vmem [#allocation2], %s571
        %s573 = sand.u32 %s102, 1
        %s574 = scalar_lea.sflag [#allocation5], %s573
        %s575 = sand.u32 %s102, 1
        %s576 = smul.addr %s575, 8
        %s577 = scalar_lea.vmem [#allocation4], %s576
        // Predicated region
        $region29: #{tpu_custom_call.1} parent=27 // pred_check
          %p578 = pneg %p86
        $region30: #{tpu_custom_call.1} parent=27 // pred_check_branch
          %580 = sbr.rel (%p578) target = $region32
        $region31: #{tpu_custom_call.1} parent=27 // pred_region
          %s581 = smul.u32 24, %s21
          %s583 = ssub.s32 3072, 3072
          %584 = vsyncadd %s569, %s583
          %s585 = smul.addr %s581, 128
          %s586 = scalar_lea.hbm %s2, %s585
          %s587 = sshll.u32 %s572, 4
          %s588 = int_to_ptr.vmem [resolvable:$true] %s587
          %593 = dma.vmem_to_hbm [thread:$0]  %s588, 3072, %s586, %s569, 128, 128, 8
        $region32: #{tpu_custom_call.1} parent=27 // pred_fallthru
          _
        // Predicated region
        $region33: #{tpu_custom_call.1} parent=27 // pred_check
          %p594 = pneg %p112
        $region34: #{tpu_custom_call.1} parent=27 // pred_check_branch
          %596 = sbr.rel (%p594) target = $region36
        $region35: #{tpu_custom_call.1} parent=27 // pred_region
          %s598 = ssub.s32 128, 128
          %599 = vsyncadd %s574, %s598
          %s600 = smul.addr %s21, 128
          %s601 = scalar_lea.hbm %s3, %s600
          %s603 = sshll.u32 %s577, 4
          %s604 = int_to_ptr.vmem [resolvable:$true] %s603
          %606 = dma.vmem_to_hbm [thread:$0]  %s604, 128, %s601, %s574
        $region36: #{tpu_custom_call.1} parent=27 // pred_fallthru
          _
      $region28: #{tpu_custom_call.1} parent=5 // pred_fallthru
        _
      %p607 = scmp.le.s32.totalorder 2, %s16
      // Predicated region
      $region37: #{tpu_custom_call.1} parent=5 // pred_check
        %p608 = pneg %p607
      $region38: #{tpu_custom_call.1} parent=5 // pred_check_branch
        %610 = sbr.rel (%p608) target = $region40
      $region39: #{tpu_custom_call.1} parent=5 // pred_region
        %s611 = ssub.s32 %s16, 2
        // Predicated region
        $region41: #{tpu_custom_call.1} parent=39 // pred_check
          %p612 = pneg %p92
        $region42: #{tpu_custom_call.1} parent=39 // pred_check_branch
          %614 = sbr.rel (%p612) target = $region44
        $region43: #{tpu_custom_call.1} parent=39 // pred_region
          %s615 = sand.u32 %s77, 1
          %s616 = scalar_lea.sflag [#allocation3], %s615
          %s617 = sand.u32 %s77, 1
          %s618 = smul.addr %s617, 192
          %s619 = scalar_lea.vmem [#allocation2], %s618
          %620 = dma.done %s616, 3072
        $region44: #{tpu_custom_call.1} parent=39 // pred_fallthru
          _
        // Predicated region
        $region45: #{tpu_custom_call.1} parent=39 // pred_check
          %p621 = pneg %p118
        $region46: #{tpu_custom_call.1} parent=39 // pred_check_branch
          %623 = sbr.rel (%p621) target = $region48
        $region47: #{tpu_custom_call.1} parent=39 // pred_region
          %s624 = sand.u32 %s103, 1
          %s625 = scalar_lea.sflag [#allocation5], %s624
          %s626 = sand.u32 %s103, 1
          %s627 = smul.addr %s626, 8
          %s628 = scalar_lea.vmem [#allocation4], %s627
          %629 = dma.done %s625, 128
        $region48: #{tpu_custom_call.1} parent=39 // pred_fallthru
          _
      $region40: #{tpu_custom_call.1} parent=5 // pred_fallthru
        _
    $region6: #{tpu_custom_call.1} parent=1 // loop_footer
      %s20 = sadd.s32 1, %s16
    $region7: #{tpu_custom_call.1} parent=1 // loop_footer_branch
      %15 = sbr.rel target = $region3
    $region8: #{tpu_custom_call.1} parent=1 // loop_exit
      _
    %630 = vsyncpa [#allocation3], 1
    %s631 = scalar_lea.sflag [#allocation3], 1
    %632 = vsyncpa %s631, 1
    %633 = vsyncpa [#allocation5], 1
    %s634 = scalar_lea.sflag [#allocation5], 1
    %635 = vsyncpa %s634, 1

</llo_original>
